<compile_context>
chip_gen: v7x
topology: tpu7x:2x2x1
jax: 0.10.0
libtpu: 0.0.40
codegen_flags: <defaults>
</compile_context>

<pallas_src>
import jax
import jax.numpy as jnp
from jax.experimental import pallas as pl
from jax.experimental.pallas import tpu as pltpu

HIDDEN = 1024  # Hyperparameters.FeedForwardClassifier.HIDDEN_LAYER_DIMENSION


def _round_up(n: int, m: int) -> int:
    return ((n + m - 1) // m) * m


def _ffc_kernel(x_ref, w1_ref, w2_ref, b2_ref, o_ref):
    # Layer 1: [tb, F_p] bf16 @ [F_p, H] bf16 on the MXU, f32 accumulation.
    # b1 is folded into W1 (row F) against the 1.0 column of x, so no bias add.
    h = jnp.dot(x_ref[...], w1_ref[...], preferred_element_type=jnp.float32)
    h = jnp.maximum(h, 0.0)
    # TODO(synk): dropout (p=0.03) is identity at inference; training-mode
    # dropout would use pltpu.prng_seed / pltpu.prng_random_bits here.

    # Layer 2: lane-dense [1, H] weight -> VPU multiply + XLU lane reduce
    # (no MXU, no 128x-padded [H, 1] buffer).
    logit = jnp.sum(h * w2_ref[...], axis=-1, keepdims=True) + b2_ref[...]

    # Sigmoid head (exp lowers to the EUP slot). mean over dim of size 1 == identity.
    o_ref[...] = jax.nn.sigmoid(logit).astype(o_ref.dtype)


def feed_forward_classifier(x, w1, b1, w2, b2, *, batch_tile=2048):
    """x: [B, F] f32; w1: [F, H]; b1: [1, H]; w2: [H, 1]; b2: [1, 1]. Returns [B, 1] f32."""
    B, F = x.shape
    H = w1.shape[1]
    assert w1.shape == (F, H) and b1.shape == (1, H)
    assert w2.shape == (H, 1) and b2.shape == (1, 1)

    # ---- host-side layout / dtype prep (done once, outside the kernel) ----
    # Contraction dim padded to a lane multiple WITH room for the bias column.
    F_p = _round_up(F + 1, 128)                   # 200 -> 256

    # Adaptive batch tiling: minimize padding in the last tile, and give v7x's
    # two TensorCores an even number of tiles when the batch is big enough.
    n_tiles = pl.cdiv(B, batch_tile)
    if B >= 1024 and n_tiles < 2:
        n_tiles = 2                               # let both v7x TCs work
    if n_tiles > 1 and n_tiles % 2 == 1:
        n_tiles += 1                              # even tile count across 2 TCs
    tb = _round_up(pl.cdiv(B, n_tiles), 8)        # multiple of 8 sublanes
    B_p = tb * n_tiles

    x_p = jnp.zeros((B_p, F_p), jnp.bfloat16)
    x_p = x_p.at[:B, :F].set(x.astype(jnp.bfloat16))
    x_p = x_p.at[:B, F].set(1.0)                  # bias column (only real rows)

    w1_p = jnp.zeros((F_p, H), jnp.bfloat16)
    w1_p = w1_p.at[:F, :].set(w1.astype(jnp.bfloat16))
    w1_p = w1_p.at[F, :].set(b1[0].astype(jnp.bfloat16))   # folded bias row

    w2_t = w2.reshape(1, H).astype(jnp.float32)   # lane-dense second-layer weight
    b2_f = b2.astype(jnp.float32)

    grid = (n_tiles,)

    # Explicit scoped-VMEM budget: covers big tiles on v5e (16 MiB default) and
    # stays well below v7x's 64 MiB physical VMEM.
    vmem_need = (
        2 * tb * F_p * 2          # x tile, double-buffered bf16
        + 2 * F_p * H * 2         # resident W1 (default double-buffered)
        + 2 * (H * 4 + 4)         # w2, b2
        + 2 * tb * 4              # output tile
        + 2 * tb * H * 4          # f32 h + elementwise temp
    )
    vmem_limit = min(56 << 20, max(32 << 20, int(vmem_need * 3 // 2)))

    bytes_accessed = (
        x_p.size * 2 + w1_p.size * 2 + (w2_t.size + 1) * 4 + B_p * 4
    )

    out = pl.pallas_call(
        _ffc_kernel,
        out_shape=jax.ShapeDtypeStruct((B_p, 1), jnp.float32),
        grid_spec=pltpu.PrefetchScalarGridSpec(
            num_scalar_prefetch=0,
            grid=grid,
            in_specs=[
                pl.BlockSpec((tb, F_p), lambda i: (i, 0)),   # x: tiled over batch
                pl.BlockSpec((F_p, H), lambda i: (0, 0)),    # W1 (+ folded b1): VMEM-resident
                pl.BlockSpec((1, H), lambda i: (0, 0)),      # W2 (lane-dense)
                pl.BlockSpec((1, 1), lambda i: (0, 0)),      # b2
            ],
            out_specs=pl.BlockSpec((tb, 1), lambda i: (i, 0)),
        ),
        compiler_params=pltpu.CompilerParams(
            dimension_semantics=("parallel",),   # batch tiles shard across TCs on v7x
            vmem_limit_bytes=vmem_limit,
        ),
        cost_estimate=pl.CostEstimate(
            flops=2 * B_p * F_p * H + 2 * B_p * H,
            transcendentals=B_p,
            bytes_accessed=bytes_accessed,
        ),
    )(x_p, w1_p, w2_t, b2_f)
    return out[:B]


def _reference(x, w1, b1, w2, b2):
    h = jnp.maximum(x @ w1 + b1, 0.0)
    y = jax.nn.sigmoid(h @ w2 + b2)
    return jnp.mean(y, axis=1).reshape(-1, 1)


if __name__ == "__main__":
    key = jax.random.PRNGKey(0)
    k_x, k_w1, k_b1, k_w2, k_b2 = jax.random.split(key, 5)

    B = 8             # batch
    IN_FEATURES = 200

    # Deterministic init matching torch.nn.Linear's U(-1/sqrt(fan_in), ...) scaling;
    # weights stored as [in, out].
    lim1 = 1.0 / jnp.sqrt(jnp.float32(IN_FEATURES))
    lim2 = 1.0 / jnp.sqrt(jnp.float32(HIDDEN))
    x = jax.random.normal(k_x, (B, IN_FEATURES), dtype=jnp.float32)
    w1 = jax.random.uniform(k_w1, (IN_FEATURES, HIDDEN), jnp.float32, -lim1, lim1)
    b1 = jax.random.uniform(k_b1, (1, HIDDEN), jnp.float32, -lim1, lim1)
    w2 = jax.random.uniform(k_w2, (HIDDEN, 1), jnp.float32, -lim2, lim2)
    b2 = jax.random.uniform(k_b2, (1, 1), jnp.float32, -lim2, lim2)

    out = jax.block_until_ready(feed_forward_classifier(x, w1, b1, w2, b2))
    ref = _reference(x, w1, b1, w2, b2)

    assert out.shape == (B, 1), out.shape
    # bf16 weights/activations in the first matmul -> looser tolerance vs f32 reference.
    assert jnp.allclose(out, ref, atol=1e-2, rtol=1e-2), (out, ref)

    print("KERNEL_OK")
</pallas_src>

<mosaic_0001>
module attributes {stable_mosaic.version = 11 : i64} {
  func.func @_ffc_kernel(%arg0: i32, %arg1: memref<8x256xbf16, #tpu.memory_space<vmem>>, %arg2: memref<256x1024xbf16, #tpu.memory_space<vmem>>, %arg3: memref<1x1024xf32, #tpu.memory_space<vmem>>, %arg4: memref<1x1xf32, #tpu.memory_space<vmem>>, %arg5: memref<8x1xf32, #tpu.memory_space<vmem>>) attributes {dimension_semantics = [#tpu.dimension_semantics<parallel>], iteration_bounds = array<i64: 1>, scalar_prefetch = 0 : i64, scratch_operands = 0 : i64, tpu.core_type = #tpu.core_type<tc>, window_params = [{transform_indices = @transform_0, window_bounds = array<i64: 8, 256>}, {pipeline_mode = #tpu.pipeline_mode<synchronous>, transform_indices = @transform_1, window_bounds = array<i64: 256, 1024>}, {pipeline_mode = #tpu.pipeline_mode<synchronous>, transform_indices = @transform_2, window_bounds = array<i64: 1, 1024>}, {pipeline_mode = #tpu.pipeline_mode<synchronous>, transform_indices = @transform_3, window_bounds = array<i64: 1, 1>}, {transform_indices = @transform_4, window_bounds = array<i64: 8, 1>}]} {
    %c0 = arith.constant 0 : index
    %c0_0 = arith.constant 0 : index
    %0 = vector.load %arg1[%c0, %c0_0] : memref<8x256xbf16, #tpu.memory_space<vmem>>, vector<8x256xbf16>
    %c0_1 = arith.constant 0 : index
    %c0_2 = arith.constant 0 : index
    %1 = vector.load %arg2[%c0_1, %c0_2] : memref<256x1024xbf16, #tpu.memory_space<vmem>>, vector<256x1024xbf16>
    %cst = arith.constant dense<0.000000e+00> : vector<8x1024xf32>
    %2 = tpu.matmul %0, %1, %cst {dimension_numbers = #tpu.dot_dimension_numbers<[1], [0], [0], [1], [0, 0, 1, 1], [], []>} : vector<8x256xbf16>, vector<256x1024xbf16>, vector<8x1024xf32> -> vector<8x1024xf32>
    %cst_3 = arith.constant 0.000000e+00 : f32
    %3 = vector.broadcast %cst_3 : f32 to vector<8x1024xf32>
    %4 = arith.maximumf %2, %3 : vector<8x1024xf32>
    %c0_4 = arith.constant 0 : index
    %c0_5 = arith.constant 0 : index
    %5 = vector.load %arg3[%c0_4, %c0_5] : memref<1x1024xf32, #tpu.memory_space<vmem>>, vector<1x1024xf32>
    %6 = vector.broadcast %5 : vector<1x1024xf32> to vector<8x1024xf32>
    %7 = arith.mulf %4, %6 : vector<8x1024xf32>
    %cst_6 = arith.constant dense<0.000000e+00> : vector<8xf32>
    %8 = vector.multi_reduction <add>, %7, %cst_6 [1] : vector<8x1024xf32> to vector<8xf32>
    %9 = vector.shape_cast %8 : vector<8xf32> to vector<8x1xf32>
    %c0_7 = arith.constant 0 : index
    %c0_8 = arith.constant 0 : index
    %10 = vector.load %arg4[%c0_7, %c0_8] : memref<1x1xf32, #tpu.memory_space<vmem>>, vector<1x1xf32>
    %11 = vector.broadcast %10 : vector<1x1xf32> to vector<8x1xf32>
    %12 = arith.addf %9, %11 : vector<8x1xf32>
    %13 = arith.negf %12 : vector<8x1xf32>
    %14 = math.exp %13 : vector<8x1xf32>
    %cst_9 = arith.constant 1.000000e+00 : f32
    %15 = vector.broadcast %cst_9 : f32 to vector<8x1xf32>
    %16 = arith.addf %15, %14 : vector<8x1xf32>
    %17 = arith.divf %15, %16 : vector<8x1xf32>
    %c0_10 = arith.constant 0 : index
    %c0_11 = arith.constant 0 : index
    %18 = vector.load %arg5[%c0_10, %c0_11] : memref<8x1xf32, #tpu.memory_space<vmem>>, vector<8x1xf32>
    tpu.vector_store %arg5[%c0_10, %c0_11], %17 {strides = array<i32>} : memref<8x1xf32, #tpu.memory_space<vmem>>, vector<8x1xf32>,
    return
  }
  func.func @transform_0(%arg0: i32) -> (i32, i32) {
    %c0_i32 = arith.constant 0 : i32
    %c0_i32_0 = arith.constant 0 : i32
    return %arg0, %c0_i32 : i32, i32
  }
  func.func @transform_1(%arg0: i32) -> (i32, i32) {
    %c0_i32 = arith.constant 0 : i32
    %c0_i32_0 = arith.constant 0 : i32
    %c0_i32_1 = arith.constant 0 : i32
    return %c0_i32, %c0_i32_0 : i32, i32
  }
  func.func @transform_2(%arg0: i32) -> (i32, i32) {
    %c0_i32 = arith.constant 0 : i32
    %c0_i32_0 = arith.constant 0 : i32
    %c0_i32_1 = arith.constant 0 : i32
    return %c0_i32, %c0_i32_0 : i32, i32
  }
  func.func @transform_3(%arg0: i32) -> (i32, i32) {
    %c0_i32 = arith.constant 0 : i32
    %c0_i32_0 = arith.constant 0 : i32
    %c0_i32_1 = arith.constant 0 : i32
    return %c0_i32, %c0_i32_0 : i32, i32
  }
  func.func @transform_4(%arg0: i32) -> (i32, i32) {
    %c0_i32 = arith.constant 0 : i32
    %c0_i32_0 = arith.constant 0 : i32
    return %arg0, %c0_i32 : i32, i32
  }
}

</mosaic_0001>

<llo_original>
// kernel: tpu_custom_call.1
$region0: #{tpu_custom_call.1}
  #allocation0 [shape = 'u32[]', space=smem, size = 0x4, offset = 0x4, fixed_abs, tag = 'smem constant byte address 0x4 - core index']
  #allocation1 [shape = 'u32[144,128]{1,0:T(1,128)}', space=vmem, size = 0x12000, scoped, tag = 'internal scratch']
  #allocation2 [shape = 'f32[1,1]{1,0:T(1,128)S(1)}', space=vmem, size = 0x200, scoped, tag = 'scoped memory for tpu_custom_call.1']
  %s0 = inlined_call_operand.hbm [shape: bf16[8,256], index: 0, kind: input, shape index: {}]
  %s1 = inlined_call_operand.hbm [shape: bf16[256,1024], index: 1, kind: input, shape index: {}]
  %s2 = inlined_call_operand.vmem [shape: f32[1,1024], index: 2, kind: input, shape index: {}]
  %s3 = inlined_call_operand.<no memory space> [shape: f32[1,1], index: 3, kind: input, shape index: {}]
  %s4 = inlined_call_operand.vmem [shape: f32[8,1], index: 4, kind: output, shape index: {}]
  %s5 = sld [smem:[#allocation0]]
  $region34: #{tpu_custom_call.1} parent=0
    _
  %s7 = ssub.s32 1, %s5
  %s8 = scalar_select 0, %s7, %s5
  %v9 = vstv %s3
  %10 = vst [vmem:[#allocation2] sm:$0x1] %v9
  $region1: #{tpu_custom_call.1} parent=0
    #allocation3 [shape = 'u8[4096]{0}', space=vmem, size = 0x1000, scoped, tag = 'input window, operand 0, single buffered']
    #allocation4 [shape = 's32[1]{0}', space=sflag, size = 0x4, scoped, tag = 'scoped memory for tpu_custom_call.1']
    #allocation5 [shape = 'u8[524288]{0}', space=vmem, size = 0x80000, scoped, tag = 'input window, operand 1, single buffered']
    #allocation6 [shape = 's32[1]{0}', space=sflag, size = 0x4, scoped, tag = 'scoped memory for tpu_custom_call.1']
    %11 = vsyncpa [#allocation4], 0
    %12 = vsyncpa [#allocation6], 0
    // Predicated region
    $region2: #{tpu_custom_call.1} parent=1 // pred_check
      _
    $region3: #{tpu_custom_call.1} parent=1 // pred_check_branch
      %14 = sbr.rel (0) target = $region5
    $region4: #{tpu_custom_call.1} parent=1 // pred_region
      %s16 = ssub.s32 128, 128
      %17 = vsyncadd [#allocation4], %s16
      %s19 = sshll.u32 [#allocation3], 4
      %s20 = int_to_ptr.vmem [resolvable:$true] %s19
      %22 = dma.hbm_to_vmem [thread:$0]  %s0, 128, %s20, [#allocation4]
    $region5: #{tpu_custom_call.1} parent=1 // pred_fallthru
      _
    // Predicated region
    $region6: #{tpu_custom_call.1} parent=1 // pred_check
      _
    $region7: #{tpu_custom_call.1} parent=1 // pred_check_branch
      %24 = sbr.rel (0) target = $region9
    $region8: #{tpu_custom_call.1} parent=1 // pred_region
      %s26 = ssub.s32 16384, 16384
      %27 = vsyncadd [#allocation6], %s26
      %s28 = sshll.u32 [#allocation5], 4
      %s29 = int_to_ptr.vmem [resolvable:$true] %s28
      %34 = dma.hbm_to_vmem [thread:$0]  %s1, 16384, %s29, [#allocation6], 512, 512, 32
    $region9: #{tpu_custom_call.1} parent=1 // pred_fallthru
      _
    // Predicated region
    $region10: #{tpu_custom_call.1} parent=1 // pred_check
      _
    $region11: #{tpu_custom_call.1} parent=1 // pred_check_branch
      %36 = sbr.rel (0) target = $region13
    $region12: #{tpu_custom_call.1} parent=1 // pred_region
      _
    $region13: #{tpu_custom_call.1} parent=1 // pred_fallthru
      _
    // Predicated region
    $region14: #{tpu_custom_call.1} parent=1 // pred_check
      _
    $region15: #{tpu_custom_call.1} parent=1 // pred_check_branch
      %38 = sbr.rel (0) target = $region17
    $region16: #{tpu_custom_call.1} parent=1 // pred_region
      _
    $region17: #{tpu_custom_call.1} parent=1 // pred_fallthru
      _
    // Predicated region
    $region18: #{tpu_custom_call.1} parent=1 // pred_check
      _
    $region19: #{tpu_custom_call.1} parent=1 // pred_check_branch
      %40 = sbr.rel (0) target = $region21
    $region20: #{tpu_custom_call.1} parent=1 // pred_region
      %41 = dma.done [#allocation4], 128
    $region21: #{tpu_custom_call.1} parent=1 // pred_fallthru
      _
    // Predicated region
    $region22: #{tpu_custom_call.1} parent=1 // pred_check
      _
    $region23: #{tpu_custom_call.1} parent=1 // pred_check_branch
      %43 = sbr.rel (0) target = $region25
    $region24: #{tpu_custom_call.1} parent=1 // pred_region
      %44 = dma.done [#allocation6], 16384
    $region25: #{tpu_custom_call.1} parent=1 // pred_fallthru
      _
    %v45 = vld [vmem:[#allocation3] sm:$0xff]
    %v46 = vld [vmem:[#allocation5] sm:$0xff]
    %v47 = vld [vmem:[#allocation5 + $0x8] sm:$0xff]
    %v48 = vld [vmem:[#allocation5 + $0x10] sm:$0xff]
    %v49 = vld [vmem:[#allocation5 + $0x18] sm:$0xff]
    %v50 = vld [vmem:[#allocation5 + $0x20] sm:$0xff]
    %v51 = vld [vmem:[#allocation5 + $0x28] sm:$0xff]
    %v52 = vld [vmem:[#allocation5 + $0x30] sm:$0xff]
    %v53 = vld [vmem:[#allocation5 + $0x38] sm:$0xff]
    %v54 = vld [vmem:[#allocation5 + $0x40] sm:$0xff]
    %v55 = vld [vmem:[#allocation5 + $0x48] sm:$0xff]
    %v56 = vld [vmem:[#allocation5 + $0x50] sm:$0xff]
    %v57 = vld [vmem:[#allocation5 + $0x58] sm:$0xff]
    %v58 = vld [vmem:[#allocation5 + $0x60] sm:$0xff]
    %v59 = vld [vmem:[#allocation5 + $0x68] sm:$0xff]
    %v60 = vld [vmem:[#allocation5 + $0x70] sm:$0xff]
    %v61 = vld [vmem:[#allocation5 + $0x78] sm:$0xff]
    %v62 = vld [vmem:[#allocation5 + $0x80] sm:$0xff]
    %v63 = vld [vmem:[#allocation5 + $0x88] sm:$0xff]
    %v64 = vld [vmem:[#allocation5 + $0x90] sm:$0xff]
    %v65 = vld [vmem:[#allocation5 + $0x98] sm:$0xff]
    %v66 = vld [vmem:[#allocation5 + $0xa0] sm:$0xff]
    %v67 = vld [vmem:[#allocation5 + $0xa8] sm:$0xff]
    %v68 = vld [vmem:[#allocation5 + $0xb0] sm:$0xff]
    %v69 = vld [vmem:[#allocation5 + $0xb8] sm:$0xff]
    %v70 = vld [vmem:[#allocation5 + $0xc0] sm:$0xff]
    %v71 = vld [vmem:[#allocation5 + $0xc8] sm:$0xff]
    %v72 = vld [vmem:[#allocation5 + $0xd0] sm:$0xff]
    %v73 = vld [vmem:[#allocation5 + $0xd8] sm:$0xff]
    %v74 = vld [vmem:[#allocation5 + $0xe0] sm:$0xff]
    %v75 = vld [vmem:[#allocation5 + $0xe8] sm:$0xff]
    %v76 = vld [vmem:[#allocation5 + $0xf0] sm:$0xff]
    %v77 = vld [vmem:[#allocation5 + $0xf8] sm:$0xff]
    %v78 = vld [vmem:[#allocation5 + $0x100] sm:$0xff]
    %v79 = vld [vmem:[#allocation5 + $0x108] sm:$0xff]
    %v80 = vld [vmem:[#allocation5 + $0x110] sm:$0xff]
    %v81 = vld [vmem:[#allocation5 + $0x118] sm:$0xff]
    %v82 = vld [vmem:[#allocation5 + $0x120] sm:$0xff]
    %v83 = vld [vmem:[#allocation5 + $0x128] sm:$0xff]
    %v84 = vld [vmem:[#allocation5 + $0x130] sm:$0xff]
    %v85 = vld [vmem:[#allocation5 + $0x138] sm:$0xff]
    %v86 = vld [vmem:[#allocation5 + $0x140] sm:$0xff]
    %v87 = vld [vmem:[#allocation5 + $0x148] sm:$0xff]
    %v88 = vld [vmem:[#allocation5 + $0x150] sm:$0xff]
    %v89 = vld [vmem:[#allocation5 + $0x158] sm:$0xff]
    %v90 = vld [vmem:[#allocation5 + $0x160] sm:$0xff]
    %v91 = vld [vmem:[#allocation5 + $0x168] sm:$0xff]
    %v92 = vld [vmem:[#allocation5 + $0x170] sm:$0xff]
    %v93 = vld [vmem:[#allocation5 + $0x178] sm:$0xff]
    %v94 = vld [vmem:[#allocation5 + $0x180] sm:$0xff]
    %v95 = vld [vmem:[#allocation5 + $0x188] sm:$0xff]
    %v96 = vld [vmem:[#allocation5 + $0x190] sm:$0xff]
    %v97 = vld [vmem:[#allocation5 + $0x198] sm:$0xff]
    %v98 = vld [vmem:[#allocation5 + $0x1a0] sm:$0xff]
    %v99 = vld [vmem:[#allocation5 + $0x1a8] sm:$0xff]
    %v100 = vld [vmem:[#allocation5 + $0x1b0] sm:$0xff]
    %v101 = vld [vmem:[#allocation5 + $0x1b8] sm:$0xff]
    %v102 = vld [vmem:[#allocation5 + $0x1c0] sm:$0xff]
    %v103 = vld [vmem:[#allocation5 + $0x1c8] sm:$0xff]
    %v104 = vld [vmem:[#allocation5 + $0x1d0] sm:$0xff]
    %v105 = vld [vmem:[#allocation5 + $0x1d8] sm:$0xff]
    %v106 = vld [vmem:[#allocation5 + $0x1e0] sm:$0xff]
    %v107 = vld [vmem:[#allocation5 + $0x1e8] sm:$0xff]
    %v108 = vld [vmem:[#allocation5 + $0x1f0] sm:$0xff]
    %v109 = vld [vmem:[#allocation5 + $0x1f8] sm:$0xff]
    %v110 = vld [vmem:[#allocation5 + $0x200] sm:$0xff]
    %v111 = vld [vmem:[#allocation5 + $0x208] sm:$0xff]
    %v112 = vld [vmem:[#allocation5 + $0x210] sm:$0xff]
    %v113 = vld [vmem:[#allocation5 + $0x218] sm:$0xff]
    %v114 = vld [vmem:[#allocation5 + $0x220] sm:$0xff]
    %v115 = vld [vmem:[#allocation5 + $0x228] sm:$0xff]
    %v116 = vld [vmem:[#allocation5 + $0x230] sm:$0xff]
    %v117 = vld [vmem:[#allocation5 + $0x238] sm:$0xff]
    %v118 = vld [vmem:[#allocation5 + $0x240] sm:$0xff]
    %v119 = vld [vmem:[#allocation5 + $0x248] sm:$0xff]
    %v120 = vld [vmem:[#allocation5 + $0x250] sm:$0xff]
    %v121 = vld [vmem:[#allocation5 + $0x258] sm:$0xff]
    %v122 = vld [vmem:[#allocation5 + $0x260] sm:$0xff]
    %v123 = vld [vmem:[#allocation5 + $0x268] sm:$0xff]
    %v124 = vld [vmem:[#allocation5 + $0x270] sm:$0xff]
    %v125 = vld [vmem:[#allocation5 + $0x278] sm:$0xff]
    %v126 = vld [vmem:[#allocation5 + $0x280] sm:$0xff]
    %v127 = vld [vmem:[#allocation5 + $0x288] sm:$0xff]
    %v128 = vld [vmem:[#allocation5 + $0x290] sm:$0xff]
    %v129 = vld [vmem:[#allocation5 + $0x298] sm:$0xff]
    %v130 = vld [vmem:[#allocation5 + $0x2a0] sm:$0xff]
    %v131 = vld [vmem:[#allocation5 + $0x2a8] sm:$0xff]
    %v132 = vld [vmem:[#allocation5 + $0x2b0] sm:$0xff]
    %v133 = vld [vmem:[#allocation5 + $0x2b8] sm:$0xff]
    %v134 = vld [vmem:[#allocation5 + $0x2c0] sm:$0xff]
    %v135 = vld [vmem:[#allocation5 + $0x2c8] sm:$0xff]
    %v136 = vld [vmem:[#allocation5 + $0x2d0] sm:$0xff]
    %v137 = vld [vmem:[#allocation5 + $0x2d8] sm:$0xff]
    %v138 = vld [vmem:[#allocation5 + $0x2e0] sm:$0xff]
    %v139 = vld [vmem:[#allocation5 + $0x2e8] sm:$0xff]
    %v140 = vld [vmem:[#allocation5 + $0x2f0] sm:$0xff]
    %v141 = vld [vmem:[#allocation5 + $0x2f8] sm:$0xff]
    %v142 = vld [vmem:[#allocation5 + $0x300] sm:$0xff]
    %v143 = vld [vmem:[#allocation5 + $0x308] sm:$0xff]
    %v144 = vld [vmem:[#allocation5 + $0x310] sm:$0xff]
    %v145 = vld [vmem:[#allocation5 + $0x318] sm:$0xff]
    %v146 = vld [vmem:[#allocation5 + $0x320] sm:$0xff]
    %v147 = vld [vmem:[#allocation5 + $0x328] sm:$0xff]
    %v148 = vld [vmem:[#allocation5 + $0x330] sm:$0xff]
    %v149 = vld [vmem:[#allocation5 + $0x338] sm:$0xff]
    %v150 = vld [vmem:[#allocation5 + $0x340] sm:$0xff]
    %v151 = vld [vmem:[#allocation5 + $0x348] sm:$0xff]
    %v152 = vld [vmem:[#allocation5 + $0x350] sm:$0xff]
    %v153 = vld [vmem:[#allocation5 + $0x358] sm:$0xff]
    %v154 = vld [vmem:[#allocation5 + $0x360] sm:$0xff]
    %v155 = vld [vmem:[#allocation5 + $0x368] sm:$0xff]
    %v156 = vld [vmem:[#allocation5 + $0x370] sm:$0xff]
    %v157 = vld [vmem:[#allocation5 + $0x378] sm:$0xff]
    %v158 = vld [vmem:[#allocation5 + $0x380] sm:$0xff]
    %v159 = vld [vmem:[#allocation5 + $0x388] sm:$0xff]
    %v160 = vld [vmem:[#allocation5 + $0x390] sm:$0xff]
    %v161 = vld [vmem:[#allocation5 + $0x398] sm:$0xff]
    %v162 = vld [vmem:[#allocation5 + $0x3a0] sm:$0xff]
    %v163 = vld [vmem:[#allocation5 + $0x3a8] sm:$0xff]
    %v164 = vld [vmem:[#allocation5 + $0x3b0] sm:$0xff]
    %v165 = vld [vmem:[#allocation5 + $0x3b8] sm:$0xff]
    %v166 = vld [vmem:[#allocation5 + $0x3c0] sm:$0xff]
    %v167 = vld [vmem:[#allocation5 + $0x3c8] sm:$0xff]
    %v168 = vld [vmem:[#allocation5 + $0x3d0] sm:$0xff]
    %v169 = vld [vmem:[#allocation5 + $0x3d8] sm:$0xff]
    %v170 = vld [vmem:[#allocation5 + $0x3e0] sm:$0xff]
    %v171 = vld [vmem:[#allocation5 + $0x3e8] sm:$0xff]
    %v172 = vld [vmem:[#allocation5 + $0x3f0] sm:$0xff]
    %v173 = vld [vmem:[#allocation5 + $0x3f8] sm:$0xff]
    %v175 = vunpack.c.l.b16 %v45
    %v176 = vunpack.c.h.b16 %v45
    %v177 = vpack.c.b16 %v175, %v175
    %v178 = vpack.c.b16 %v176, %v176
    %v309 = vunpack.c.l.b16 %v46
    %v310 = vunpack.c.h.b16 %v46
    %v311 = vunpack.c.l.b16 %v47
    %v312 = vunpack.c.h.b16 %v47
    %v313 = vunpack.c.l.b16 %v48
    %v314 = vunpack.c.h.b16 %v48
    %v315 = vunpack.c.l.b16 %v49
    %v316 = vunpack.c.h.b16 %v49
    %v317 = vunpack.c.l.b16 %v50
    %v318 = vunpack.c.h.b16 %v50
    %v319 = vunpack.c.l.b16 %v51
    %v320 = vunpack.c.h.b16 %v51
    %v321 = vunpack.c.l.b16 %v52
    %v322 = vunpack.c.h.b16 %v52
    %v323 = vunpack.c.l.b16 %v53
    %v324 = vunpack.c.h.b16 %v53
    %v325 = vunpack.c.l.b16 %v54
    %v326 = vunpack.c.h.b16 %v54
    %v327 = vunpack.c.l.b16 %v55
    %v328 = vunpack.c.h.b16 %v55
    %v329 = vunpack.c.l.b16 %v56
    %v330 = vunpack.c.h.b16 %v56
    %v331 = vunpack.c.l.b16 %v57
    %v332 = vunpack.c.h.b16 %v57
    %v333 = vunpack.c.l.b16 %v58
    %v334 = vunpack.c.h.b16 %v58
    %v335 = vunpack.c.l.b16 %v59
    %v336 = vunpack.c.h.b16 %v59
    %v337 = vunpack.c.l.b16 %v60
    %v338 = vunpack.c.h.b16 %v60
    %v339 = vunpack.c.l.b16 %v61
    %v340 = vunpack.c.h.b16 %v61
    %v341 = vunpack.c.l.b16 %v62
    %v342 = vunpack.c.h.b16 %v62
    %v343 = vunpack.c.l.b16 %v63
    %v344 = vunpack.c.h.b16 %v63
    %v345 = vunpack.c.l.b16 %v64
    %v346 = vunpack.c.h.b16 %v64
    %v347 = vunpack.c.l.b16 %v65
    %v348 = vunpack.c.h.b16 %v65
    %v349 = vunpack.c.l.b16 %v66
    %v350 = vunpack.c.h.b16 %v66
    %v351 = vunpack.c.l.b16 %v67
    %v352 = vunpack.c.h.b16 %v67
    %v353 = vunpack.c.l.b16 %v68
    %v354 = vunpack.c.h.b16 %v68
    %v355 = vunpack.c.l.b16 %v69
    %v356 = vunpack.c.h.b16 %v69
    %v357 = vunpack.c.l.b16 %v70
    %v358 = vunpack.c.h.b16 %v70
    %v359 = vunpack.c.l.b16 %v71
    %v360 = vunpack.c.h.b16 %v71
    %v361 = vunpack.c.l.b16 %v72
    %v362 = vunpack.c.h.b16 %v72
    %v363 = vunpack.c.l.b16 %v73
    %v364 = vunpack.c.h.b16 %v73
    %v365 = vunpack.c.l.b16 %v74
    %v366 = vunpack.c.h.b16 %v74
    %v367 = vunpack.c.l.b16 %v75
    %v368 = vunpack.c.h.b16 %v75
    %v369 = vunpack.c.l.b16 %v76
    %v370 = vunpack.c.h.b16 %v76
    %v371 = vunpack.c.l.b16 %v77
    %v372 = vunpack.c.h.b16 %v77
    %v373 = vunpack.c.l.b16 %v78
    %v374 = vunpack.c.h.b16 %v78
    %v375 = vunpack.c.l.b16 %v79
    %v376 = vunpack.c.h.b16 %v79
    %v377 = vunpack.c.l.b16 %v80
    %v378 = vunpack.c.h.b16 %v80
    %v379 = vunpack.c.l.b16 %v81
    %v380 = vunpack.c.h.b16 %v81
    %v381 = vunpack.c.l.b16 %v82
    %v382 = vunpack.c.h.b16 %v82
    %v383 = vunpack.c.l.b16 %v83
    %v384 = vunpack.c.h.b16 %v83
    %v385 = vunpack.c.l.b16 %v84
    %v386 = vunpack.c.h.b16 %v84
    %v387 = vunpack.c.l.b16 %v85
    %v388 = vunpack.c.h.b16 %v85
    %v389 = vunpack.c.l.b16 %v86
    %v390 = vunpack.c.h.b16 %v86
    %v391 = vunpack.c.l.b16 %v87
    %v392 = vunpack.c.h.b16 %v87
    %v393 = vunpack.c.l.b16 %v88
    %v394 = vunpack.c.h.b16 %v88
    %v395 = vunpack.c.l.b16 %v89
    %v396 = vunpack.c.h.b16 %v89
    %v397 = vunpack.c.l.b16 %v90
    %v398 = vunpack.c.h.b16 %v90
    %v399 = vunpack.c.l.b16 %v91
    %v400 = vunpack.c.h.b16 %v91
    %v401 = vunpack.c.l.b16 %v92
    %v402 = vunpack.c.h.b16 %v92
    %v403 = vunpack.c.l.b16 %v93
    %v404 = vunpack.c.h.b16 %v93
    %v405 = vunpack.c.l.b16 %v94
    %v406 = vunpack.c.h.b16 %v94
    %v407 = vunpack.c.l.b16 %v95
    %v408 = vunpack.c.h.b16 %v95
    %v409 = vunpack.c.l.b16 %v96
    %v410 = vunpack.c.h.b16 %v96
    %v411 = vunpack.c.l.b16 %v97
    %v412 = vunpack.c.h.b16 %v97
    %v413 = vunpack.c.l.b16 %v98
    %v414 = vunpack.c.h.b16 %v98
    %v415 = vunpack.c.l.b16 %v99
    %v416 = vunpack.c.h.b16 %v99
    %v417 = vunpack.c.l.b16 %v100
    %v418 = vunpack.c.h.b16 %v100
    %v419 = vunpack.c.l.b16 %v101
    %v420 = vunpack.c.h.b16 %v101
    %v421 = vunpack.c.l.b16 %v102
    %v422 = vunpack.c.h.b16 %v102
    %v423 = vunpack.c.l.b16 %v103
    %v424 = vunpack.c.h.b16 %v103
    %v425 = vunpack.c.l.b16 %v104
    %v426 = vunpack.c.h.b16 %v104
    %v427 = vunpack.c.l.b16 %v105
    %v428 = vunpack.c.h.b16 %v105
    %v429 = vunpack.c.l.b16 %v106
    %v430 = vunpack.c.h.b16 %v106
    %v431 = vunpack.c.l.b16 %v107
    %v432 = vunpack.c.h.b16 %v107
    %v433 = vunpack.c.l.b16 %v108
    %v434 = vunpack.c.h.b16 %v108
    %v435 = vunpack.c.l.b16 %v109
    %v436 = vunpack.c.h.b16 %v109
    %v437 = vunpack.c.l.b16 %v110
    %v438 = vunpack.c.h.b16 %v110
    %v439 = vunpack.c.l.b16 %v111
    %v440 = vunpack.c.h.b16 %v111
    %v441 = vunpack.c.l.b16 %v112
    %v442 = vunpack.c.h.b16 %v112
    %v443 = vunpack.c.l.b16 %v113
    %v444 = vunpack.c.h.b16 %v113
    %v445 = vunpack.c.l.b16 %v114
    %v446 = vunpack.c.h.b16 %v114
    %v447 = vunpack.c.l.b16 %v115
    %v448 = vunpack.c.h.b16 %v115
    %v449 = vunpack.c.l.b16 %v116
    %v450 = vunpack.c.h.b16 %v116
    %v451 = vunpack.c.l.b16 %v117
    %v452 = vunpack.c.h.b16 %v117
    %v453 = vunpack.c.l.b16 %v118
    %v454 = vunpack.c.h.b16 %v118
    %v455 = vunpack.c.l.b16 %v119
    %v456 = vunpack.c.h.b16 %v119
    %v457 = vunpack.c.l.b16 %v120
    %v458 = vunpack.c.h.b16 %v120
    %v459 = vunpack.c.l.b16 %v121
    %v460 = vunpack.c.h.b16 %v121
    %v461 = vunpack.c.l.b16 %v122
    %v462 = vunpack.c.h.b16 %v122
    %v463 = vunpack.c.l.b16 %v123
    %v464 = vunpack.c.h.b16 %v123
    %v465 = vunpack.c.l.b16 %v124
    %v466 = vunpack.c.h.b16 %v124
    %v467 = vunpack.c.l.b16 %v125
    %v468 = vunpack.c.h.b16 %v125
    %v469 = vunpack.c.l.b16 %v126
    %v470 = vunpack.c.h.b16 %v126
    %v471 = vunpack.c.l.b16 %v127
    %v472 = vunpack.c.h.b16 %v127
    %v473 = vunpack.c.l.b16 %v128
    %v474 = vunpack.c.h.b16 %v128
    %v475 = vunpack.c.l.b16 %v129
    %v476 = vunpack.c.h.b16 %v129
    %v477 = vunpack.c.l.b16 %v130
    %v478 = vunpack.c.h.b16 %v130
    %v479 = vunpack.c.l.b16 %v131
    %v480 = vunpack.c.h.b16 %v131
    %v481 = vunpack.c.l.b16 %v132
    %v482 = vunpack.c.h.b16 %v132
    %v483 = vunpack.c.l.b16 %v133
    %v484 = vunpack.c.h.b16 %v133
    %v485 = vunpack.c.l.b16 %v134
    %v486 = vunpack.c.h.b16 %v134
    %v487 = vunpack.c.l.b16 %v135
    %v488 = vunpack.c.h.b16 %v135
    %v489 = vunpack.c.l.b16 %v136
    %v490 = vunpack.c.h.b16 %v136
    %v491 = vunpack.c.l.b16 %v137
    %v492 = vunpack.c.h.b16 %v137
    %v493 = vunpack.c.l.b16 %v138
    %v494 = vunpack.c.h.b16 %v138
    %v495 = vunpack.c.l.b16 %v139
    %v496 = vunpack.c.h.b16 %v139
    %v497 = vunpack.c.l.b16 %v140
    %v498 = vunpack.c.h.b16 %v140
    %v499 = vunpack.c.l.b16 %v141
    %v500 = vunpack.c.h.b16 %v141
    %v501 = vunpack.c.l.b16 %v142
    %v502 = vunpack.c.h.b16 %v142
    %v503 = vunpack.c.l.b16 %v143
    %v504 = vunpack.c.h.b16 %v143
    %v505 = vunpack.c.l.b16 %v144
    %v506 = vunpack.c.h.b16 %v144
    %v507 = vunpack.c.l.b16 %v145
    %v508 = vunpack.c.h.b16 %v145
    %v509 = vunpack.c.l.b16 %v146
    %v510 = vunpack.c.h.b16 %v146
    %v511 = vunpack.c.l.b16 %v147
    %v512 = vunpack.c.h.b16 %v147
    %v513 = vunpack.c.l.b16 %v148
    %v514 = vunpack.c.h.b16 %v148
    %v515 = vunpack.c.l.b16 %v149
    %v516 = vunpack.c.h.b16 %v149
    %v517 = vunpack.c.l.b16 %v150
    %v518 = vunpack.c.h.b16 %v150
    %v519 = vunpack.c.l.b16 %v151
    %v520 = vunpack.c.h.b16 %v151
    %v521 = vunpack.c.l.b16 %v152
    %v522 = vunpack.c.h.b16 %v152
    %v523 = vunpack.c.l.b16 %v153
    %v524 = vunpack.c.h.b16 %v153
    %v525 = vunpack.c.l.b16 %v154
    %v526 = vunpack.c.h.b16 %v154
    %v527 = vunpack.c.l.b16 %v155
    %v528 = vunpack.c.h.b16 %v155
    %v529 = vunpack.c.l.b16 %v156
    %v530 = vunpack.c.h.b16 %v156
    %v531 = vunpack.c.l.b16 %v157
    %v532 = vunpack.c.h.b16 %v157
    %v533 = vunpack.c.l.b16 %v158
    %v534 = vunpack.c.h.b16 %v158
    %v535 = vunpack.c.l.b16 %v159
    %v536 = vunpack.c.h.b16 %v159
    %v537 = vunpack.c.l.b16 %v160
    %v538 = vunpack.c.h.b16 %v160
    %v539 = vunpack.c.l.b16 %v161
    %v540 = vunpack.c.h.b16 %v161
    %v541 = vunpack.c.l.b16 %v162
    %v542 = vunpack.c.h.b16 %v162
    %v543 = vunpack.c.l.b16 %v163
    %v544 = vunpack.c.h.b16 %v163
    %v545 = vunpack.c.l.b16 %v164
    %v546 = vunpack.c.h.b16 %v164
    %v547 = vunpack.c.l.b16 %v165
    %v548 = vunpack.c.h.b16 %v165
    %v549 = vunpack.c.l.b16 %v166
    %v550 = vunpack.c.h.b16 %v166
    %v551 = vunpack.c.l.b16 %v167
    %v552 = vunpack.c.h.b16 %v167
    %v553 = vunpack.c.l.b16 %v168
    %v554 = vunpack.c.h.b16 %v168
    %v555 = vunpack.c.l.b16 %v169
    %v556 = vunpack.c.h.b16 %v169
    %v557 = vunpack.c.l.b16 %v170
    %v558 = vunpack.c.h.b16 %v170
    %v559 = vunpack.c.l.b16 %v171
    %v560 = vunpack.c.h.b16 %v171
    %v561 = vunpack.c.l.b16 %v172
    %v562 = vunpack.c.h.b16 %v172
    %v563 = vunpack.c.l.b16 %v173
    %v564 = vunpack.c.h.b16 %v173
    %v565 = vpack.c.b16 %v317, %v309
    %v566 = vpack.c.b16 %v318, %v310
    %v567 = vpack.c.b16 %v319, %v311
    %v568 = vpack.c.b16 %v320, %v312
    %v569 = vpack.c.b16 %v321, %v313
    %v570 = vpack.c.b16 %v322, %v314
    %v571 = vpack.c.b16 %v323, %v315
    %v572 = vpack.c.b16 %v324, %v316
    %v573 = vpack.c.b16 %v333, %v325
    %v574 = vpack.c.b16 %v334, %v326
    %v575 = vpack.c.b16 %v335, %v327
    %v576 = vpack.c.b16 %v336, %v328
    %v577 = vpack.c.b16 %v337, %v329
    %v578 = vpack.c.b16 %v338, %v330
    %v579 = vpack.c.b16 %v339, %v331
    %v580 = vpack.c.b16 %v340, %v332
    %v581 = vpack.c.b16 %v349, %v341
    %v582 = vpack.c.b16 %v350, %v342
    %v583 = vpack.c.b16 %v351, %v343
    %v584 = vpack.c.b16 %v352, %v344
    %v585 = vpack.c.b16 %v353, %v345
    %v586 = vpack.c.b16 %v354, %v346
    %v587 = vpack.c.b16 %v355, %v347
    %v588 = vpack.c.b16 %v356, %v348
    %v589 = vpack.c.b16 %v365, %v357
    %v590 = vpack.c.b16 %v366, %v358
    %v591 = vpack.c.b16 %v367, %v359
    %v592 = vpack.c.b16 %v368, %v360
    %v593 = vpack.c.b16 %v369, %v361
    %v594 = vpack.c.b16 %v370, %v362
    %v595 = vpack.c.b16 %v371, %v363
    %v596 = vpack.c.b16 %v372, %v364
    %v597 = vpack.c.b16 %v381, %v373
    %v598 = vpack.c.b16 %v382, %v374
    %v599 = vpack.c.b16 %v383, %v375
    %v600 = vpack.c.b16 %v384, %v376
    %v601 = vpack.c.b16 %v385, %v377
    %v602 = vpack.c.b16 %v386, %v378
    %v603 = vpack.c.b16 %v387, %v379
    %v604 = vpack.c.b16 %v388, %v380
    %v605 = vpack.c.b16 %v397, %v389
    %v606 = vpack.c.b16 %v398, %v390
    %v607 = vpack.c.b16 %v399, %v391
    %v608 = vpack.c.b16 %v400, %v392
    %v609 = vpack.c.b16 %v401, %v393
    %v610 = vpack.c.b16 %v402, %v394
    %v611 = vpack.c.b16 %v403, %v395
    %v612 = vpack.c.b16 %v404, %v396
    %v613 = vpack.c.b16 %v413, %v405
    %v614 = vpack.c.b16 %v414, %v406
    %v615 = vpack.c.b16 %v415, %v407
    %v616 = vpack.c.b16 %v416, %v408
    %v617 = vpack.c.b16 %v417, %v409
    %v618 = vpack.c.b16 %v418, %v410
    %v619 = vpack.c.b16 %v419, %v411
    %v620 = vpack.c.b16 %v420, %v412
    %v621 = vpack.c.b16 %v429, %v421
    %v622 = vpack.c.b16 %v430, %v422
    %v623 = vpack.c.b16 %v431, %v423
    %v624 = vpack.c.b16 %v432, %v424
    %v625 = vpack.c.b16 %v433, %v425
    %v626 = vpack.c.b16 %v434, %v426
    %v627 = vpack.c.b16 %v435, %v427
    %v628 = vpack.c.b16 %v436, %v428
    %v629 = vpack.c.b16 %v445, %v437
    %v630 = vpack.c.b16 %v446, %v438
    %v631 = vpack.c.b16 %v447, %v439
    %v632 = vpack.c.b16 %v448, %v440
    %v633 = vpack.c.b16 %v449, %v441
    %v634 = vpack.c.b16 %v450, %v442
    %v635 = vpack.c.b16 %v451, %v443
    %v636 = vpack.c.b16 %v452, %v444
    %v637 = vpack.c.b16 %v461, %v453
    %v638 = vpack.c.b16 %v462, %v454
    %v639 = vpack.c.b16 %v463, %v455
    %v640 = vpack.c.b16 %v464, %v456
    %v641 = vpack.c.b16 %v465, %v457
    %v642 = vpack.c.b16 %v466, %v458
    %v643 = vpack.c.b16 %v467, %v459
    %v644 = vpack.c.b16 %v468, %v460
    %v645 = vpack.c.b16 %v477, %v469
    %v646 = vpack.c.b16 %v478, %v470
    %v647 = vpack.c.b16 %v479, %v471
    %v648 = vpack.c.b16 %v480, %v472
    %v649 = vpack.c.b16 %v481, %v473
    %v650 = vpack.c.b16 %v482, %v474
    %v651 = vpack.c.b16 %v483, %v475
    %v652 = vpack.c.b16 %v484, %v476
    %v653 = vpack.c.b16 %v493, %v485
    %v654 = vpack.c.b16 %v494, %v486
    %v655 = vpack.c.b16 %v495, %v487
    %v656 = vpack.c.b16 %v496, %v488
    %v657 = vpack.c.b16 %v497, %v489
    %v658 = vpack.c.b16 %v498, %v490
    %v659 = vpack.c.b16 %v499, %v491
    %v660 = vpack.c.b16 %v500, %v492
    %v661 = vpack.c.b16 %v509, %v501
    %v662 = vpack.c.b16 %v510, %v502
    %v663 = vpack.c.b16 %v511, %v503
    %v664 = vpack.c.b16 %v512, %v504
    %v665 = vpack.c.b16 %v513, %v505
    %v666 = vpack.c.b16 %v514, %v506
    %v667 = vpack.c.b16 %v515, %v507
    %v668 = vpack.c.b16 %v516, %v508
    %v669 = vpack.c.b16 %v525, %v517
    %v670 = vpack.c.b16 %v526, %v518
    %v671 = vpack.c.b16 %v527, %v519
    %v672 = vpack.c.b16 %v528, %v520
    %v673 = vpack.c.b16 %v529, %v521
    %v674 = vpack.c.b16 %v530, %v522
    %v675 = vpack.c.b16 %v531, %v523
    %v676 = vpack.c.b16 %v532, %v524
    %v677 = vpack.c.b16 %v541, %v533
    %v678 = vpack.c.b16 %v542, %v534
    %v679 = vpack.c.b16 %v543, %v535
    %v680 = vpack.c.b16 %v544, %v536
    %v681 = vpack.c.b16 %v545, %v537
    %v682 = vpack.c.b16 %v546, %v538
    %v683 = vpack.c.b16 %v547, %v539
    %v684 = vpack.c.b16 %v548, %v540
    %v685 = vpack.c.b16 %v557, %v549
    %v686 = vpack.c.b16 %v558, %v550
    %v687 = vpack.c.b16 %v559, %v551
    %v688 = vpack.c.b16 %v560, %v552
    %v689 = vpack.c.b16 %v561, %v553
    %v690 = vpack.c.b16 %v562, %v554
    %v691 = vpack.c.b16 %v563, %v555
    %v692 = vpack.c.b16 %v564, %v556
    %821 = vmatprep.subr.bf16.mxu0 %v566
    %822 = vmatpush1.bf16.msra.mxu0 %v565
    %823 = vmatprep.subr.bf16.mxu0 %v574
    %824 = vmatpush1.bf16.msra.mxu0 %v573
    %825 = vmatprep.subr.bf16.mxu0 %v582
    %826 = vmatpush1.bf16.msra.mxu0 %v581
    %827 = vmatprep.subr.bf16.mxu0 %v590
    %828 = vmatpush1.bf16.msra.mxu0 %v589
    %829 = vmatprep.subr.bf16.mxu0 %v598
    %830 = vmatpush1.bf16.msra.mxu0 %v597
    %831 = vmatprep.subr.bf16.mxu0 %v606
    %832 = vmatpush1.bf16.msra.mxu0 %v605
    %833 = vmatprep.subr.bf16.mxu0 %v614
    %834 = vmatpush1.bf16.msra.mxu0 %v613
    %835 = vmatprep.subr.bf16.mxu0 %v622
    %836 = vmatpush1.bf16.msra.mxu0 %v621
    %837 = vmatprep.subr.bf16.mxu0 %v630
    %838 = vmatpush1.bf16.msra.mxu0 %v629
    %839 = vmatprep.subr.bf16.mxu0 %v638
    %840 = vmatpush1.bf16.msra.mxu0 %v637
    %841 = vmatprep.subr.bf16.mxu0 %v646
    %842 = vmatpush1.bf16.msra.mxu0 %v645
    %843 = vmatprep.subr.bf16.mxu0 %v654
    %844 = vmatpush1.bf16.msra.mxu0 %v653
    %845 = vmatprep.subr.bf16.mxu0 %v662
    %846 = vmatpush1.bf16.msra.mxu0 %v661
    %847 = vmatprep.subr.bf16.mxu0 %v670
    %848 = vmatpush1.bf16.msra.mxu0 %v669
    %849 = vmatprep.subr.bf16.mxu0 %v678
    %850 = vmatpush1.bf16.msra.mxu0 %v677
    %851 = vmatprep.subr.bf16.mxu0 %v686
    %852 = vmatpush1.bf16.msra.mxu0 %v685
    %853 = vmatprep.mubr.bf16.mxu0 %v178
    %854 = vmatmul.mubr.bf16.gmra.mrb[0].mxu0 %v177
    %v855 = vpop.f32.mrb[0].mxu0
    %v856 = vadd.f32 0.0, %v855
    %v857 = vpop.f32.mrb[0].mxu0
    %v858 = vadd.f32 0.0, %v857
    %v859 = vpop.f32.mrb[0].mxu0
    %v860 = vpop.f32.mrb[0].mxu0
    %861 = vdwg.mxu0
    %862 = vmatprep.subr.bf16.mxu0 %v568
    %863 = vmatpush1.bf16.msra.mxu0 %v567
    %864 = vmatprep.subr.bf16.mxu0 %v576
    %865 = vmatpush1.bf16.msra.mxu0 %v575
    %866 = vmatprep.subr.bf16.mxu0 %v584
    %867 = vmatpush1.bf16.msra.mxu0 %v583
    %868 = vmatprep.subr.bf16.mxu0 %v592
    %869 = vmatpush1.bf16.msra.mxu0 %v591
    %870 = vmatprep.subr.bf16.mxu0 %v600
    %871 = vmatpush1.bf16.msra.mxu0 %v599
    %872 = vmatprep.subr.bf16.mxu0 %v608
    %873 = vmatpush1.bf16.msra.mxu0 %v607
    %874 = vmatprep.subr.bf16.mxu0 %v616
    %875 = vmatpush1.bf16.msra.mxu0 %v615
    %876 = vmatprep.subr.bf16.mxu0 %v624
    %877 = vmatpush1.bf16.msra.mxu0 %v623
    %878 = vmatprep.subr.bf16.mxu0 %v632
    %879 = vmatpush1.bf16.msra.mxu0 %v631
    %880 = vmatprep.subr.bf16.mxu0 %v640
    %881 = vmatpush1.bf16.msra.mxu0 %v639
    %882 = vmatprep.subr.bf16.mxu0 %v648
    %883 = vmatpush1.bf16.msra.mxu0 %v647
    %884 = vmatprep.subr.bf16.mxu0 %v656
    %885 = vmatpush1.bf16.msra.mxu0 %v655
    %886 = vmatprep.subr.bf16.mxu0 %v664
    %887 = vmatpush1.bf16.msra.mxu0 %v663
    %888 = vmatprep.subr.bf16.mxu0 %v672
    %889 = vmatpush1.bf16.msra.mxu0 %v671
    %890 = vmatprep.subr.bf16.mxu0 %v680
    %891 = vmatpush1.bf16.msra.mxu0 %v679
    %892 = vmatprep.subr.bf16.mxu0 %v688
    %893 = vmatpush1.bf16.msra.mxu0 %v687
    %894 = vmatprep.mubr.bf16.mxu0 %v178
    %895 = vmatmul.mubr.bf16.gmra.mrb[0].mxu0 %v177
    %v896 = vpop.f32.mrb[0].mxu0
    %v897 = vadd.f32 0.0, %v896
    %v898 = vpop.f32.mrb[0].mxu0
    %v899 = vadd.f32 0.0, %v898
    %v900 = vpop.f32.mrb[0].mxu0
    %v901 = vpop.f32.mrb[0].mxu0
    %902 = vdwg.mxu0
    %903 = vmatprep.subr.bf16.mxu0 %v570
    %904 = vmatpush1.bf16.msra.mxu0 %v569
    %905 = vmatprep.subr.bf16.mxu0 %v578
    %906 = vmatpush1.bf16.msra.mxu0 %v577
    %907 = vmatprep.subr.bf16.mxu0 %v586
    %908 = vmatpush1.bf16.msra.mxu0 %v585
    %909 = vmatprep.subr.bf16.mxu0 %v594
    %910 = vmatpush1.bf16.msra.mxu0 %v593
    %911 = vmatprep.subr.bf16.mxu0 %v602
    %912 = vmatpush1.bf16.msra.mxu0 %v601
    %913 = vmatprep.subr.bf16.mxu0 %v610
    %914 = vmatpush1.bf16.msra.mxu0 %v609
    %915 = vmatprep.subr.bf16.mxu0 %v618
    %916 = vmatpush1.bf16.msra.mxu0 %v617
    %917 = vmatprep.subr.bf16.mxu0 %v626
    %918 = vmatpush1.bf16.msra.mxu0 %v625
    %919 = vmatprep.subr.bf16.mxu0 %v634
    %920 = vmatpush1.bf16.msra.mxu0 %v633
    %921 = vmatprep.subr.bf16.mxu0 %v642
    %922 = vmatpush1.bf16.msra.mxu0 %v641
    %923 = vmatprep.subr.bf16.mxu0 %v650
    %924 = vmatpush1.bf16.msra.mxu0 %v649
    %925 = vmatprep.subr.bf16.mxu0 %v658
    %926 = vmatpush1.bf16.msra.mxu0 %v657
    %927 = vmatprep.subr.bf16.mxu0 %v666
    %928 = vmatpush1.bf16.msra.mxu0 %v665
    %929 = vmatprep.subr.bf16.mxu0 %v674
    %930 = vmatpush1.bf16.msra.mxu0 %v673
    %931 = vmatprep.subr.bf16.mxu0 %v682
    %932 = vmatpush1.bf16.msra.mxu0 %v681
    %933 = vmatprep.subr.bf16.mxu0 %v690
    %934 = vmatpush1.bf16.msra.mxu0 %v689
    %935 = vmatprep.mubr.bf16.mxu0 %v178
    %936 = vmatmul.mubr.bf16.gmra.mrb[0].mxu0 %v177
    %v937 = vpop.f32.mrb[0].mxu0
    %v938 = vadd.f32 0.0, %v937
    %v939 = vpop.f32.mrb[0].mxu0
    %v940 = vadd.f32 0.0, %v939
    %v941 = vpop.f32.mrb[0].mxu0
    %v942 = vpop.f32.mrb[0].mxu0
    %943 = vdwg.mxu0
    %944 = vmatprep.subr.bf16.mxu0 %v572
    %945 = vmatpush1.bf16.msra.mxu0 %v571
    %946 = vmatprep.subr.bf16.mxu0 %v580
    %947 = vmatpush1.bf16.msra.mxu0 %v579
    %948 = vmatprep.subr.bf16.mxu0 %v588
    %949 = vmatpush1.bf16.msra.mxu0 %v587
    %950 = vmatprep.subr.bf16.mxu0 %v596
    %951 = vmatpush1.bf16.msra.mxu0 %v595
    %952 = vmatprep.subr.bf16.mxu0 %v604
    %953 = vmatpush1.bf16.msra.mxu0 %v603
    %954 = vmatprep.subr.bf16.mxu0 %v612
    %955 = vmatpush1.bf16.msra.mxu0 %v611
    %956 = vmatprep.subr.bf16.mxu0 %v620
    %957 = vmatpush1.bf16.msra.mxu0 %v619
    %958 = vmatprep.subr.bf16.mxu0 %v628
    %959 = vmatpush1.bf16.msra.mxu0 %v627
    %960 = vmatprep.subr.bf16.mxu0 %v636
    %961 = vmatpush1.bf16.msra.mxu0 %v635
    %962 = vmatprep.subr.bf16.mxu0 %v644
    %963 = vmatpush1.bf16.msra.mxu0 %v643
    %964 = vmatprep.subr.bf16.mxu0 %v652
    %965 = vmatpush1.bf16.msra.mxu0 %v651
    %966 = vmatprep.subr.bf16.mxu0 %v660
    %967 = vmatpush1.bf16.msra.mxu0 %v659
    %968 = vmatprep.subr.bf16.mxu0 %v668
    %969 = vmatpush1.bf16.msra.mxu0 %v667
    %970 = vmatprep.subr.bf16.mxu0 %v676
    %971 = vmatpush1.bf16.msra.mxu0 %v675
    %972 = vmatprep.subr.bf16.mxu0 %v684
    %973 = vmatpush1.bf16.msra.mxu0 %v683
    %974 = vmatprep.subr.bf16.mxu0 %v692
    %975 = vmatpush1.bf16.msra.mxu0 %v691
    %976 = vmatprep.mubr.bf16.mxu0 %v178
    %977 = vmatmul.mubr.bf16.gmra.mrb[0].mxu0 %v177
    %v978 = vpop.f32.mrb[0].mxu0
    %v979 = vadd.f32 0.0, %v978
    %v980 = vpop.f32.mrb[0].mxu0
    %v981 = vadd.f32 0.0, %v980
    %v982 = vpop.f32.mrb[0].mxu0
    %v983 = vpop.f32.mrb[0].mxu0
    %984 = vdwg.mxu0
    %v985 = vmax.f32 %v856, 0.0
    %v986 = vmax.f32 %v858, 0.0
    %v987 = vmax.f32 %v897, 0.0
    %v988 = vmax.f32 %v899, 0.0
    %v989 = vmax.f32 %v938, 0.0
    %v990 = vmax.f32 %v940, 0.0
    %v991 = vmax.f32 %v979, 0.0
    %v992 = vmax.f32 %v981, 0.0
    %v993 = vld [vmem:[%s2] sm:$0xff]
    %v995 = vlaneseq
    %v996 = vshrl.u32 %v995, 7
    %v997 = vsub.s32 0, %v996
    %v998 = vrot.slane %v993, %v997
    %v999 = vlaneseq
    %v1000 = vshrl.u32 %v999, 7
    %v1001 = vsub.s32 1, %v1000
    %v1002 = vrot.slane %v993, %v1001
    %v1003 = vlaneseq
    %v1004 = vshrl.u32 %v1003, 7
    %v1005 = vsub.s32 2, %v1004
    %v1006 = vrot.slane %v993, %v1005
    %v1007 = vlaneseq
    %v1008 = vshrl.u32 %v1007, 7
    %v1009 = vsub.s32 3, %v1008
    %v1010 = vrot.slane %v993, %v1009
    %v1011 = vlaneseq
    %v1012 = vshrl.u32 %v1011, 7
    %v1013 = vsub.s32 4, %v1012
    %v1014 = vrot.slane %v993, %v1013
    %v1015 = vlaneseq
    %v1016 = vshrl.u32 %v1015, 7
    %v1017 = vsub.s32 5, %v1016
    %v1018 = vrot.slane %v993, %v1017
    %v1019 = vlaneseq
    %v1020 = vshrl.u32 %v1019, 7
    %v1021 = vsub.s32 6, %v1020
    %v1022 = vrot.slane %v993, %v1021
    %v1023 = vlaneseq
    %v1024 = vshrl.u32 %v1023, 7
    %v1025 = vsub.s32 7, %v1024
    %v1026 = vrot.slane %v993, %v1025
    %v1035 = vmul.f32 %v985, %v998
    %v1036 = vmul.f32 %v986, %v1002
    %v1037 = vmul.f32 %v987, %v1006
    %v1038 = vmul.f32 %v988, %v1010
    %v1039 = vmul.f32 %v989, %v1014
    %v1040 = vmul.f32 %v990, %v1018
    %v1041 = vmul.f32 %v991, %v1022
    %v1042 = vmul.f32 %v992, %v1026
    %v1043 = vadd.f32 %v1035, %v1036
    %v1044 = vadd.f32 %v1043, %v1037
    %v1045 = vadd.f32 %v1044, %v1038
    %v1046 = vadd.f32 %v1045, %v1039
    %v1047 = vadd.f32 %v1046, %v1040
    %v1048 = vadd.f32 %v1047, %v1041
    %v1049 = vadd.f32 %v1048, %v1042
    %1050 = vadd.xlane.f32.xlu0 %v1049
    %v1051 = vpop.xlane.xlu0 %1050
    %v1052 = vld [vmem:[#allocation2] sm:$0x1]
    %v1054 = vlaneseq
    %v1055 = vshrl.u32 %v1054, 7
    %v1056 = vsub.s32 0, %v1055
    %v1057 = vrot.slane %v1052, %v1056
    %v1059 = vadd.f32 %v1051, %v1057
    %v1060 = vxor.u32 %v1059, 2147483648
    %v1061 = vmul.f32 %v1060, 1.442695
    %v1062 = vpow.pop %v1061
    %v1063 = vadd.f32 %v1062, 1.0
    %v1064 = vrcp.pop %v1063
    %v1065 = vmul.f32 1.0, %v1064
    %vm1066 = vcmask 7168
    %1067 = vst.msk [vmem:[%s4] sm:$0xff] %vm1066, %v1065
    // Predicated region
    $region26: #{tpu_custom_call.1} parent=1 // pred_check
      _
    $region27: #{tpu_custom_call.1} parent=1 // pred_check_branch
      %1069 = sbr.rel (0) target = $region29
    $region28: #{tpu_custom_call.1} parent=1 // pred_region
      _
    $region29: #{tpu_custom_call.1} parent=1 // pred_fallthru
      _
    // Predicated region
    $region30: #{tpu_custom_call.1} parent=1 // pred_check
      _
    $region31: #{tpu_custom_call.1} parent=1 // pred_check_branch
      %1071 = sbr.rel (0) target = $region33
    $region32: #{tpu_custom_call.1} parent=1 // pred_region
      _
    $region33: #{tpu_custom_call.1} parent=1 // pred_fallthru
      _
    %1072 = vsyncpa [#allocation4], 1
    %1073 = vsyncpa [#allocation6], 1

</llo_original>
